<compile_context>
chip_gen: v6e
topology: v6e:2x2x1
jax: 0.10.0
libtpu: 0.0.40
codegen_flags: <defaults>
</compile_context>

<pallas_src>
import jax
import jax.numpy as jnp
from jax.experimental import pallas as pl
from jax.experimental.pallas import tpu as pltpu


def _mish_kernel(x_ref, o_ref):
    x = x_ref[...].astype(jnp.float32)
    # Numerically stable single-exp form of tanh(softplus(x)).
    t = jnp.exp(-jnp.abs(x))                       # t in (0, 1], never overflows
    pos = x >= 0.0
    num = jnp.where(pos, 1.0 + 2.0 * t, t * (t + 2.0))
    den = num + jnp.where(pos, 2.0 * t * t, 2.0)
    o_ref[...] = (x * (num / den)).astype(o_ref.dtype)


def mish(x: jax.Array, *, block_rows: int = 4096) -> jax.Array:
    """Elementwise Mish. Accepts any shape; tiles a lane-dense (rows, 128) view."""
    orig_shape = x.shape
    orig_dtype = x.dtype
    n = x.size
    lane = 128

    x_flat = jnp.ravel(x)
    rem = n % lane
    padded = rem != 0
    if padded:
        # Only pad the few (<128) trailing elements needed for lane alignment.
        x_flat = jnp.pad(x_flat, (0, lane - rem))
    rows = x_flat.size // lane
    x2d = x_flat.reshape(rows, lane)

    # Big streaming blocks; clamp for small inputs (full-array block is legal).
    br = min(block_rows, rows)
    grid = (pl.cdiv(rows, br),)

    itemsize = jnp.dtype(orig_dtype).itemsize
    cost = pl.CostEstimate(
        flops=10 * n,
        transcendentals=2 * n,          # exp + divide
        bytes_accessed=2 * n * itemsize,
    )

    out2d = pl.pallas_call(
        _mish_kernel,
        out_shape=jax.ShapeDtypeStruct((rows, lane), orig_dtype),
        grid_spec=pltpu.PrefetchScalarGridSpec(
            num_scalar_prefetch=0,
            grid=grid,
            in_specs=[pl.BlockSpec((br, lane), lambda i: (i, 0))],
            out_specs=pl.BlockSpec((br, lane), lambda i: (i, 0)),
        ),
        compiler_params=pltpu.CompilerParams(
            dimension_semantics=("parallel",),
        ),
        cost_estimate=cost,
    )(x2d)

    if padded:
        out = out2d.reshape(-1)[:n].reshape(orig_shape)
    else:
        out = out2d.reshape(orig_shape)
    return out


def mish_ref(x):
    x32 = x.astype(jnp.float32)
    sp = jnp.maximum(x32, 0.0) + jnp.log1p(jnp.exp(-jnp.abs(x32)))
    return (x32 * jnp.tanh(sp)).astype(x.dtype)


if __name__ == "__main__":
    key = jax.random.PRNGKey(0)

    # NCHW input, consistent with how Mish is used inside conv stacks.
    x = jax.random.normal(key, (2, 4, 16, 16), dtype=jnp.float32) * 3.0
    y = jax.block_until_ready(mish(x))
    y_ref = mish_ref(x)
    assert y.shape == x.shape and y.dtype == x.dtype
    assert jnp.allclose(y, y_ref, atol=1e-5, rtol=1e-5)

    # Wide-range stability check (single-exp rewrite must not overflow).
    xw = jnp.linspace(-90.0, 90.0, 2048, dtype=jnp.float32).reshape(2, 4, 16, 16)
    yw = jax.block_until_ready(mish(xw))
    assert jnp.allclose(yw, mish_ref(xw), atol=1e-5, rtol=1e-5)

    # Non-multiple-of-128 element count exercises the (minimal) pad path.
    xo = jax.random.normal(jax.random.PRNGKey(1), (3, 5, 7), dtype=jnp.float32) * 5.0
    yo = jax.block_until_ready(mish(xo))
    assert yo.shape == xo.shape
    assert jnp.allclose(yo, mish_ref(xo), atol=1e-5, rtol=1e-5)

    # bf16 boundary (halved HBM traffic); f32 compute inside the kernel.
    xb = (jax.random.normal(jax.random.PRNGKey(2), (2, 4, 16, 16)) * 3.0).astype(jnp.bfloat16)
    yb = jax.block_until_ready(mish(xb))
    assert yb.dtype == jnp.bfloat16
    assert jnp.allclose(yb.astype(jnp.float32), mish_ref(xb).astype(jnp.float32),
                        atol=2e-2, rtol=2e-2)

    print("KERNEL_OK")
</pallas_src>

<mosaic_0001>
module attributes {stable_mosaic.version = 11 : i64} {
  func.func @_mish_kernel(%arg0: i32, %arg1: memref<16x128xf32, #tpu.memory_space<vmem>>, %arg2: memref<16x128xf32, #tpu.memory_space<vmem>>) attributes {dimension_semantics = [#tpu.dimension_semantics<parallel>], iteration_bounds = array<i64: 1>, scalar_prefetch = 0 : i64, scratch_operands = 0 : i64, tpu.core_type = #tpu.core_type<tc>, window_params = [{transform_indices = @transform_0, window_bounds = array<i64: 16, 128>}, {transform_indices = @transform_1, window_bounds = array<i64: 16, 128>}]} {
    %c0 = arith.constant 0 : index
    %c0_0 = arith.constant 0 : index
    %0 = vector.load %arg1[%c0, %c0_0] : memref<16x128xf32, #tpu.memory_space<vmem>>, vector<16x128xf32>
    %1 = math.absf %0 : vector<16x128xf32>
    %cst = arith.constant 0.000000e+00 : f32
    %2 = vector.broadcast %cst : f32 to vector<16x128xf32>
    %3 = arith.subf %2, %1 : vector<16x128xf32>
    %4 = math.exp %3 : vector<16x128xf32>
    %cst_1 = arith.constant 0.000000e+00 : f32
    %5 = vector.broadcast %cst_1 : f32 to vector<16x128xf32>
    %6 = arith.cmpf oge, %0, %5 : vector<16x128xf32>
    %cst_2 = arith.constant 2.000000e+00 : f32
    %7 = vector.broadcast %cst_2 : f32 to vector<16x128xf32>
    %8 = arith.mulf %7, %4 : vector<16x128xf32>
    %cst_3 = arith.constant 1.000000e+00 : f32
    %9 = vector.broadcast %cst_3 : f32 to vector<16x128xf32>
    %10 = arith.addf %9, %8 : vector<16x128xf32>
    %cst_4 = arith.constant 2.000000e+00 : f32
    %11 = vector.broadcast %cst_4 : f32 to vector<16x128xf32>
    %12 = arith.addf %4, %11 : vector<16x128xf32>
    %13 = arith.mulf %4, %12 : vector<16x128xf32>
    %14 = arith.select %6, %10, %13 : vector<16x128xi1>, vector<16x128xf32>
    %cst_5 = arith.constant 2.000000e+00 : f32
    %15 = vector.broadcast %cst_5 : f32 to vector<16x128xf32>
    %16 = arith.mulf %15, %4 : vector<16x128xf32>
    %17 = arith.mulf %16, %4 : vector<16x128xf32>
    %cst_6 = arith.constant 2.000000e+00 : f32
    %18 = vector.broadcast %cst_6 : f32 to vector<16x128xf32>
    %19 = arith.select %6, %17, %18 : vector<16x128xi1>, vector<16x128xf32>
    %20 = arith.addf %14, %19 : vector<16x128xf32>
    %21 = arith.divf %14, %20 : vector<16x128xf32>
    %22 = arith.mulf %0, %21 : vector<16x128xf32>
    %c0_7 = arith.constant 0 : index
    %c0_8 = arith.constant 0 : index
    %23 = vector.load %arg2[%c0_7, %c0_8] : memref<16x128xf32, #tpu.memory_space<vmem>>, vector<16x128xf32>
    tpu.vector_store %arg2[%c0_7, %c0_8], %22 {strides = array<i32>} : memref<16x128xf32, #tpu.memory_space<vmem>>, vector<16x128xf32>,
    return
  }
  func.func @transform_0(%arg0: i32) -> (i32, i32) {
    %c0_i32 = arith.constant 0 : i32
    %c0_i32_0 = arith.constant 0 : i32
    return %arg0, %c0_i32 : i32, i32
  }
  func.func @transform_1(%arg0: i32) -> (i32, i32) {
    %c0_i32 = arith.constant 0 : i32
    %c0_i32_0 = arith.constant 0 : i32
    return %arg0, %c0_i32 : i32, i32
  }
}

</mosaic_0001>

<llo_original>
// kernel: tpu_custom_call.1
$region0: #{tpu_custom_call.1}
  #allocation0 [shape = 'u32[]', space=smem, size = 0x4, offset = 0x4, fixed_abs, tag = 'smem constant byte address 0x4 - core index']
  #allocation1 [shape = 'u32[144,128]{1,0:T(1,128)}', space=vmem, size = 0x12000, scoped, tag = 'internal scratch']
  %s0 = inlined_call_operand.hbm [shape: f32[16,128], index: 0, kind: input, shape index: {}]
  %s1 = inlined_call_operand.hbm [shape: f32[16,128], index: 1, kind: output, shape index: {}]
  %s2 = sld [smem:[#allocation0]]
  $region18: #{tpu_custom_call.1} parent=0
    _
  %s4 = ssub.s32 1, %s2
  %s5 = scalar_select 0, %s4, %s2
  $region1: #{tpu_custom_call.1} parent=0
    #allocation2 [shape = 'u8[8192]{0}', space=vmem, size = 0x2000, scoped, tag = 'input window, operand 0, single buffered']
    #allocation3 [shape = 's32[1]{0}', space=sflag, size = 0x4, scoped, tag = 'scoped memory for tpu_custom_call.1']
    #allocation4 [shape = 's32[1]{0}', space=sflag, size = 0x4, scoped, tag = 'scoped memory for tpu_custom_call.1']
    #allocation5 [shape = 'u8[8192]{0}', space=vmem, size = 0x2000, scoped, tag = 'output window, operand 0, single buffered']
    %6 = vsyncpa [#allocation3], 0
    %7 = vsyncpa [#allocation4], 0
    // Predicated region
    $region2: #{tpu_custom_call.1} parent=1 // pred_check
      _
    $region3: #{tpu_custom_call.1} parent=1 // pred_check_branch
      %9 = sbr.rel (0) target = $region5
    $region4: #{tpu_custom_call.1} parent=1 // pred_region
      %s11 = ssub.s32 256, 256
      %12 = vsyncadd [#allocation3], %s11
      %s13 = sshll.u32 [#allocation2], 4
      %s14 = int_to_ptr.vmem [resolvable:$true] %s13
      %19 = dma.hbm_to_vmem [thread:$0]  %s0, 256, %s14, [#allocation3], 128, 128, 8
    $region5: #{tpu_custom_call.1} parent=1 // pred_fallthru
      _
    // Predicated region
    $region6: #{tpu_custom_call.1} parent=1 // pred_check
      _
    $region7: #{tpu_custom_call.1} parent=1 // pred_check_branch
      %21 = sbr.rel (0) target = $region9
    $region8: #{tpu_custom_call.1} parent=1 // pred_region
      %22 = dma.done [#allocation3], 256
    $region9: #{tpu_custom_call.1} parent=1 // pred_fallthru
      _
    %v23 = vld [vmem:[#allocation2] sm:$0xff]
    %v24 = vld [vmem:[#allocation2 + $0x8] sm:$0xff]
    %v25 = vand.u32 2147483647, %v23
    %v26 = vand.u32 2147483647, %v24
    %v27 = vsub.f32 0.0, %v25
    %v28 = vsub.f32 0.0, %v26
    %v29 = vmul.f32 %v27, 1.442695
    %v30 = vpow.pop %v29
    %v31 = vmul.f32 %v28, 1.442695
    %v32 = vpow.pop %v31
    %vm33 = vcmp.ge.f32.partialorder %v23, 0.0
    %vm34 = vcmp.ge.f32.partialorder %v24, 0.0
    %v35 = vmul.f32 %v30, 2.0
    %v36 = vmul.f32 %v32, 2.0
    %v37 = vadd.f32 %v35, 1.0
    %v38 = vadd.f32 %v36, 1.0
    %v39 = vadd.f32 %v30, 2.0
    %v40 = vadd.f32 %v32, 2.0
    %v41 = vmul.f32 %v30, %v39
    %v42 = vmul.f32 %v32, %v40
    %v43 = vsel %vm33, %v37, %v41
    %v44 = vsel %vm34, %v38, %v42
    %v45 = vmul.f32 %v35, %v30
    %v46 = vmul.f32 %v36, %v32
    %v47 = vsel %vm33, %v45, 2.0
    %v48 = vsel %vm34, %v46, 2.0
    %v49 = vadd.f32 %v43, %v47
    %v50 = vadd.f32 %v44, %v48
    %v51 = vrcp.pop %v49
    %v52 = vmul.f32 %v43, %v51
    %v53 = vrcp.pop %v50
    %v54 = vmul.f32 %v44, %v53
    %v55 = vmul.f32 %v23, %v52
    %v56 = vmul.f32 %v24, %v54
    %57 = vst [vmem:[#allocation5] sm:$0xff] %v55
    %58 = vst [vmem:[#allocation5 + $0x8] sm:$0xff] %v56
    // Predicated region
    $region10: #{tpu_custom_call.1} parent=1 // pred_check
      _
    $region11: #{tpu_custom_call.1} parent=1 // pred_check_branch
      %60 = sbr.rel (0) target = $region13
    $region12: #{tpu_custom_call.1} parent=1 // pred_region
      %s62 = ssub.s32 256, 256
      %63 = vsyncadd [#allocation4], %s62
      %s64 = sshll.u32 [#allocation5], 4
      %s65 = int_to_ptr.vmem [resolvable:$true] %s64
      %70 = dma.vmem_to_hbm [thread:$0]  %s65, 256, %s1, [#allocation4], 128, 128, 8
    $region13: #{tpu_custom_call.1} parent=1 // pred_fallthru
      _
    // Predicated region
    $region14: #{tpu_custom_call.1} parent=1 // pred_check
      _
    $region15: #{tpu_custom_call.1} parent=1 // pred_check_branch
      %72 = sbr.rel (0) target = $region17
    $region16: #{tpu_custom_call.1} parent=1 // pred_region
      %73 = dma.done [#allocation4], 256
    $region17: #{tpu_custom_call.1} parent=1 // pred_fallthru
      _
    %74 = vsyncpa [#allocation3], 1
    %75 = vsyncpa [#allocation4], 1

</llo_original>
